<compile_context>
chip_gen: v7x
topology: tpu7x:2x2x1
jax: 0.10.0
libtpu: 0.0.40
codegen_flags: <defaults>
</compile_context>

<pallas_src>
import numpy as np
import jax
import jax.numpy as jnp
from jax import lax
from jax.experimental import pallas as pl
from jax.experimental.pallas import tpu as pltpu

LANES = 128
CHUNK = 64            # rows per inner sweep chunk (8 vregs per live array)
UNROLL = 4            # manual unroll factor of the (dynamic-length) sweep
NVALS = 256
MAX_BLOCK_ROWS = 2048  # ~1 MiB f32 per buffer; trivially fits v5e/v6e/v7x VMEM


def init_fp8_values() -> jnp.ndarray:
    """Deterministic parameter init, identical to LearnableFP8Activation.__init__."""
    init_vals = [0.0, 0.25, 0.5, 0.75, 1.0, 1.5, 2.0, 3.0, 4.0, 6.0, 8.0, 12.0,
                 16.0, 24.0, 32.0, 48.0, -0.25, -0.5, -0.75, -1.0, -1.5, -2.0,
                 -3.0, -4.0, -6.0, -8.0, -12.0, -16.0, -24.0, -32.0, -48.0, -64.0]
    vals = sorted(set(init_vals + [float(i) for i in range(-128, 128)]))
    return jnp.asarray(vals[:NVALS], dtype=jnp.float32)


def _fp8_tanh_kernel(sched_ref, x_ref, vals_ref, mids_ref, o_ref, t_ref):
    # sched_ref: (3,) int32 SMEM  -> [k_lo, n_groups, k_mid_last]
    # x_ref:     (block_rows, 128) input dtype, VMEM
    # vals_ref:  (256,) f32 SMEM, sorted ascending
    # mids_ref:  (255,) f32 SMEM, midpoints between adjacent table entries
    # o_ref:     (block_rows, 128) f32 VMEM output block (doubles as q storage)
    # t_ref:     (CHUNK, 128) f32 VMEM scratch holding tanh(x) for one chunk
    block_rows = x_ref.shape[0]

    # Hoisted scalar reads (SMEM), reused by every chunk.
    k_lo = sched_ref[0]          # first candidate table index
    n_groups = sched_ref[1]      # ceil(#midpoint-steps / UNROLL), dynamic
    k_mid_last = sched_ref[2]    # clamp target: over-run unrolled steps are no-ops
    v_lo = vals_ref[k_lo]        # lowest candidate value (sweep init)

    def do_rows(r0, nrows):
        rows_sl = pl.ds(r0, nrows)
        t_sl = pl.ds(0, nrows)
        # tanh once per chunk on the EUP slot; stash in VMEM scratch so the
        # dynamic sweep loop below only touches refs (scalar-only loop carry).
        t_ref[t_sl, :] = jnp.tanh(x_ref[rows_sl, :].astype(jnp.float32))
        o_ref[rows_sl, :] = jnp.full((nrows, LANES), v_lo, dtype=jnp.float32)

        # Midpoint compare/select sweep over only the candidate entries:
        # q = v_{k+1} iff t > (v_k + v_{k+1})/2, ties keep the lower value ==
        # nearest-value / low-tie-break semantics of STEQuantize.
        def group(g, carry):
            t = t_ref[t_sl, :]
            q = o_ref[rows_sl, :]
            base = k_lo + g * UNROLL
            for u in range(UNROLL):                       # manual unroll
                k = jnp.minimum(base + u, k_mid_last)     # repeats are idempotent
                q = jnp.where(t > mids_ref[k], vals_ref[k + 1], q)
            o_ref[rows_sl, :] = q
            return carry

        lax.fori_loop(0, n_groups, group, 0)

    n_full = block_rows // CHUNK
    if n_full:
        def chunk_body(c, carry):
            do_rows(pl.multiple_of(c * CHUNK, CHUNK), CHUNK)
            return carry
        lax.fori_loop(0, n_full, chunk_body, 0)
    tail = block_rows - n_full * CHUNK
    if tail:                       # static tail of the block (block_rows % CHUNK)
        do_rows(n_full * CHUNK, tail)


def _choose_block_rows(rows: int) -> int:
    """Large lane-dense blocks; even step counts when small (v7x 2-TC balance)."""
    if rows <= MAX_BLOCK_ROWS:
        return rows                      # single block == full array dim
    steps = -(-rows // MAX_BLOCK_ROWS)
    if steps < 8 and steps % 2 == 1:
        steps += 1                       # keep the parallel grid-step count even
    br = -(-rows // steps)
    return -(-br // CHUNK) * CHUNK       # CHUNK- (and 8-) row aligned


def fp8_tanh(x: jnp.ndarray, fp8_values: jnp.ndarray) -> jnp.ndarray:
    """Forward pass of FP8Tanh. x: any float array (NCHW here). Returns f32."""
    orig_shape = x.shape
    n_elems = int(np.prod(orig_shape))

    # Sorted learnable table (matches torch.sort in forward) + decision midpoints.
    sorted_vals = jnp.sort(fp8_values.astype(jnp.float32))            # (256,)
    mids = (sorted_vals[:-1] + sorted_vals[1:]) * jnp.float32(0.5)    # (255,)
    n = sorted_vals.shape[0]

    # tanh(x) in [-1, 1] -> only table indices [k_lo, k_hi] can win (one-entry
    # safety margin on each side).  The kernel sweeps midpoints k_lo .. k_hi-1.
    idx_lo = jnp.clip(jnp.searchsorted(sorted_vals, jnp.float32(-1.0), side="left"), 1, n - 1)
    idx_hi = jnp.clip(jnp.searchsorted(sorted_vals, jnp.float32(1.0), side="right"), 1, n - 1)
    k_lo = idx_lo - 1
    k_hi = idx_hi
    n_steps = k_hi - k_lo                                 # >= 1 always
    n_groups = (n_steps + UNROLL - 1) // UNROLL
    k_mid_last = jnp.maximum(k_lo, k_hi - 1)
    sched = jnp.stack([k_lo, n_groups, k_mid_last]).astype(jnp.int32)

    # Flatten (elementwise op) to a lane-dense (rows, 128) slab in the native
    # dtype (cast happens in-kernel).  Only a ragged-to-128 tail needs a pad
    # copy; partial trailing grid blocks are handled by the cdiv grid.
    # TODO(synk): handle the n % 128 ragged tail in-kernel as well.
    flat = x.reshape(-1)
    pad = (-n_elems) % LANES
    if pad:
        flat = jnp.pad(flat, (0, pad))
    rows = flat.shape[0] // LANES
    x2d = flat.reshape(rows, LANES)

    block_rows = _choose_block_rows(rows)
    grid = (pl.cdiv(rows, block_rows),)

    out2d = pl.pallas_call(
        _fp8_tanh_kernel,
        out_shape=jax.ShapeDtypeStruct((rows, LANES), jnp.float32),
        grid_spec=pltpu.PrefetchScalarGridSpec(
            num_scalar_prefetch=1,                         # sweep schedule scalars
            grid=grid,
            in_specs=[
                pl.BlockSpec((block_rows, LANES), lambda i, sched: (i, 0)),
                pl.BlockSpec(memory_space=pltpu.MemorySpace.SMEM),   # sorted table
                pl.BlockSpec(memory_space=pltpu.MemorySpace.SMEM),   # midpoints
            ],
            out_specs=pl.BlockSpec((block_rows, LANES), lambda i, sched: (i, 0)),
            scratch_shapes=[pltpu.VMEM((CHUNK, LANES), jnp.float32)],
        ),
        compiler_params=pltpu.CompilerParams(
            dimension_semantics=("parallel",)),
    )(sched, x2d, sorted_vals, mids)

    out_flat = out2d.reshape(-1)
    if pad:
        out_flat = out_flat[:n_elems]
    return out_flat.reshape(orig_shape)


def _reference_numpy(x: np.ndarray, vals: np.ndarray) -> np.ndarray:
    """Pure-numpy reference mirroring the PyTorch STEQuantize(Tanh) semantics."""
    t = np.tanh(x.astype(np.float32))
    vals = np.sort(vals.astype(np.float32))
    idx = np.searchsorted(vals, t, side="left")
    idx = np.clip(idx, 1, len(vals) - 1)
    high = vals[idx]
    low = vals[idx - 1]
    return np.where(np.abs(t - low) <= np.abs(t - high), low, high)


if __name__ == "__main__":
    key = jax.random.PRNGKey(0)
    # Small NCHW input consistent with an activation module: (N=2, C=4, H=16, W=16)
    x = jax.random.normal(key, (2, 4, 16, 16), dtype=jnp.float32) * 2.0

    fp8_values = init_fp8_values()

    out = fp8_tanh(x, fp8_values)
    out = jax.block_until_ready(out)

    ref = _reference_numpy(np.asarray(x), np.asarray(fp8_values))
    np.testing.assert_allclose(np.asarray(out), ref, rtol=0, atol=0)

    print("KERNEL_OK")
</pallas_src>

<mosaic_0001>
module attributes {stable_mosaic.version = 11 : i64} {
  func.func @_fp8_tanh_kernel(%arg0: i32, %arg1: memref<3xi32, #tpu.memory_space<smem>>, %arg2: memref<16x128xf32, #tpu.memory_space<vmem>>, %arg3: memref<256xf32, #tpu.memory_space<smem>>, %arg4: memref<255xf32, #tpu.memory_space<smem>>, %arg5: memref<16x128xf32, #tpu.memory_space<vmem>>, %arg6: memref<64x128xf32, #tpu.memory_space<vmem>>) attributes {dimension_semantics = [#tpu.dimension_semantics<parallel>], iteration_bounds = array<i64: 1>, scalar_prefetch = 1 : i64, scratch_operands = 1 : i64, tpu.core_type = #tpu.core_type<tc>, window_params = [{transform_indices = @transform_0, window_bounds = array<i64: 16, 128>}, {transform_indices = @transform_1, window_bounds = array<i64: 256>}, {transform_indices = @transform_2, window_bounds = array<i64: 255>}, {transform_indices = @transform_3, window_bounds = array<i64: 16, 128>}]} {
    %c0 = arith.constant 0 : index
    %0 = memref.load %arg1[%c0] : memref<3xi32, #tpu.memory_space<smem>>
    %c1 = arith.constant 1 : index
    %1 = memref.load %arg1[%c1] : memref<3xi32, #tpu.memory_space<smem>>
    %c2 = arith.constant 2 : index
    %2 = memref.load %arg1[%c2] : memref<3xi32, #tpu.memory_space<smem>>
    %3 = arith.index_cast %0 : i32 to index
    %4 = memref.load %arg3[%3] : memref<256xf32, #tpu.memory_space<smem>>
    %c0_0 = arith.constant 0 : index
    %c0_1 = arith.constant 0 : index
    %5 = vector.load %arg2[%c0_0, %c0_1] : memref<16x128xf32, #tpu.memory_space<vmem>>, vector<16x128xf32>
    %6 = math.tanh %5 : vector<16x128xf32>
    %c0_2 = arith.constant 0 : index
    %c0_3 = arith.constant 0 : index
    %7 = vector.load %arg6[%c0_2, %c0_3] : memref<64x128xf32, #tpu.memory_space<vmem>>, vector<16x128xf32>
    tpu.vector_store %arg6[%c0_2, %c0_3], %6 {strides = array<i32>} : memref<64x128xf32, #tpu.memory_space<vmem>>, vector<16x128xf32>,
    %8 = vector.broadcast %4 : f32 to vector<16x128xf32>
    %c0_4 = arith.constant 0 : index
    %c0_5 = arith.constant 0 : index
    %9 = vector.load %arg5[%c0_4, %c0_5] : memref<16x128xf32, #tpu.memory_space<vmem>>, vector<16x128xf32>
    tpu.vector_store %arg5[%c0_4, %c0_5], %8 {strides = array<i32>} : memref<16x128xf32, #tpu.memory_space<vmem>>, vector<16x128xf32>,
    %c0_i32 = arith.constant 0 : i32
    %c0_i32_6 = arith.constant 0 : i32
    %10 = arith.subi %1, %c0_i32_6 : i32
    %11 = arith.addi %c0_i32_6, %10 : i32
    %c1_i32 = arith.constant 1 : i32
    scf.for %arg7 = %c0_i32_6 to %11 step %c1_i32  : i32 {
      %c0_7 = arith.constant 0 : index
      %c0_8 = arith.constant 0 : index
      %12 = vector.load %arg6[%c0_7, %c0_8] : memref<64x128xf32, #tpu.memory_space<vmem>>, vector<16x128xf32>
      %c0_9 = arith.constant 0 : index
      %c0_10 = arith.constant 0 : index
      %13 = vector.load %arg5[%c0_9, %c0_10] : memref<16x128xf32, #tpu.memory_space<vmem>>, vector<16x128xf32>
      %c4_i32 = arith.constant 4 : i32
      %14 = arith.muli %arg7, %c4_i32 : i32
      %15 = arith.addi %0, %14 : i32
      %c0_i32_11 = arith.constant 0 : i32
      %16 = arith.addi %15, %c0_i32_11 : i32
      %17 = arith.minsi %16, %2 : i32
      %18 = arith.index_cast %17 : i32 to index
      %19 = memref.load %arg4[%18] : memref<255xf32, #tpu.memory_space<smem>>
      %20 = vector.broadcast %19 : f32 to vector<16x128xf32>
      %21 = arith.cmpf ogt, %12, %20 : vector<16x128xf32>
      %c1_i32_12 = arith.constant 1 : i32
      %22 = arith.addi %17, %c1_i32_12 : i32
      %23 = arith.index_cast %22 : i32 to index
      %24 = memref.load %arg3[%23] : memref<256xf32, #tpu.memory_space<smem>>
      %25 = vector.broadcast %24 : f32 to vector<16x128xf32>
      %26 = arith.select %21, %25, %13 : vector<16x128xi1>, vector<16x128xf32>
      %c1_i32_13 = arith.constant 1 : i32
      %27 = arith.addi %15, %c1_i32_13 : i32
      %28 = arith.minsi %27, %2 : i32
      %29 = arith.index_cast %28 : i32 to index
      %30 = memref.load %arg4[%29] : memref<255xf32, #tpu.memory_space<smem>>
      %31 = vector.broadcast %30 : f32 to vector<16x128xf32>
      %32 = arith.cmpf ogt, %12, %31 : vector<16x128xf32>
      %c1_i32_14 = arith.constant 1 : i32
      %33 = arith.addi %28, %c1_i32_14 : i32
      %34 = arith.index_cast %33 : i32 to index
      %35 = memref.load %arg3[%34] : memref<256xf32, #tpu.memory_space<smem>>
      %36 = vector.broadcast %35 : f32 to vector<16x128xf32>
      %37 = arith.select %32, %36, %26 : vector<16x128xi1>, vector<16x128xf32>
      %c2_i32 = arith.constant 2 : i32
      %38 = arith.addi %15, %c2_i32 : i32
      %39 = arith.minsi %38, %2 : i32
      %40 = arith.index_cast %39 : i32 to index
      %41 = memref.load %arg4[%40] : memref<255xf32, #tpu.memory_space<smem>>
      %42 = vector.broadcast %41 : f32 to vector<16x128xf32>
      %43 = arith.cmpf ogt, %12, %42 : vector<16x128xf32>
      %c1_i32_15 = arith.constant 1 : i32
      %44 = arith.addi %39, %c1_i32_15 : i32
      %45 = arith.index_cast %44 : i32 to index
      %46 = memref.load %arg3[%45] : memref<256xf32, #tpu.memory_space<smem>>
      %47 = vector.broadcast %46 : f32 to vector<16x128xf32>
      %48 = arith.select %43, %47, %37 : vector<16x128xi1>, vector<16x128xf32>
      %c3_i32 = arith.constant 3 : i32
      %49 = arith.addi %15, %c3_i32 : i32
      %50 = arith.minsi %49, %2 : i32
      %51 = arith.index_cast %50 : i32 to index
      %52 = memref.load %arg4[%51] : memref<255xf32, #tpu.memory_space<smem>>
      %53 = vector.broadcast %52 : f32 to vector<16x128xf32>
      %54 = arith.cmpf ogt, %12, %53 : vector<16x128xf32>
      %c1_i32_16 = arith.constant 1 : i32
      %55 = arith.addi %50, %c1_i32_16 : i32
      %56 = arith.index_cast %55 : i32 to index
      %57 = memref.load %arg3[%56] : memref<256xf32, #tpu.memory_space<smem>>
      %58 = vector.broadcast %57 : f32 to vector<16x128xf32>
      %59 = arith.select %54, %58, %48 : vector<16x128xi1>, vector<16x128xf32>
      %c0_17 = arith.constant 0 : index
      %c0_18 = arith.constant 0 : index
      %60 = vector.load %arg5[%c0_17, %c0_18] : memref<16x128xf32, #tpu.memory_space<vmem>>, vector<16x128xf32>
      tpu.vector_store %arg5[%c0_17, %c0_18], %59 {strides = array<i32>} : memref<16x128xf32, #tpu.memory_space<vmem>>, vector<16x128xf32>,
    }
    return
  }
  func.func @transform_0(%arg0: i32, %arg1: memref<3xi32, #tpu.memory_space<smem>>) -> (i32, i32) {
    %c0_i32 = arith.constant 0 : i32
    %c0_i32_0 = arith.constant 0 : i32
    return %arg0, %c0_i32 : i32, i32
  }
  func.func @transform_1(%arg0: i32, %arg1: memref<3xi32, #tpu.memory_space<smem>>) -> i32 {
    %c0_i32 = arith.constant 0 : i32
    %c0_i32_0 = arith.constant 0 : i32
    return %c0_i32 : i32
  }
  func.func @transform_2(%arg0: i32, %arg1: memref<3xi32, #tpu.memory_space<smem>>) -> i32 {
    %c0_i32 = arith.constant 0 : i32
    %c0_i32_0 = arith.constant 0 : i32
    return %c0_i32 : i32
  }
  func.func @transform_3(%arg0: i32, %arg1: memref<3xi32, #tpu.memory_space<smem>>) -> (i32, i32) {
    %c0_i32 = arith.constant 0 : i32
    %c0_i32_0 = arith.constant 0 : i32
    return %arg0, %c0_i32 : i32, i32
  }
}

</mosaic_0001>

<llo_original>
// kernel: tpu_custom_call.1
$region0: #{tpu_custom_call.1}
  #allocation0 [shape = 'u32[]', space=smem, size = 0x4, offset = 0x4, fixed_abs, tag = 'smem constant byte address 0x4 - core index']
  #allocation1 [shape = 'u32[144,128]{1,0:T(1,128)}', space=vmem, size = 0x12000, scoped, tag = 'internal scratch']
  #allocation2 [shape = 'f32[64,128]{1,0:T(8,128)}', space=vmem, size = 0x8000, scoped, tag = 'scratch operand']
  #allocation3 [shape = 's32[1]{0}', space=sflag, size = 0x4, scoped, tag = 'scoped memory for tpu_custom_call.1']
  #allocation4 [shape = 'u8[512]{0}', space=smem, size = 0x200, scoped, tag = 'prefetched SMEM operand 0']
  %s0 = inlined_call_operand.hbm [shape: s32[3], index: 0, kind: input, shape index: {}]
  %s1 = inlined_call_operand.hbm [shape: f32[16,128], index: 1, kind: input, shape index: {}]
  %s2 = inlined_call_operand.vmem [shape: f32[256], index: 2, kind: input, shape index: {}]
  %s3 = inlined_call_operand.vmem [shape: f32[255], index: 3, kind: input, shape index: {}]
  %s4 = inlined_call_operand.hbm [shape: f32[16,128], index: 4, kind: output, shape index: {}]
  %s5 = sld [smem:[#allocation0]]
  $region41: #{tpu_custom_call.1} parent=0
    _
  %s7 = ssub.s32 1, %s5
  %s8 = scalar_select 0, %s7, %s5
  %10 = dma.hbm_to_smem %s0, 16, [#allocation4], [#allocation3]
  %11 = dma.done [#allocation3], 16
  %12 = sfence
  $region1: #{tpu_custom_call.1} parent=0
    #allocation5 [shape = 'u8[8192]{0}', space=vmem, size = 0x2000, scoped, tag = 'input window, operand 1, single buffered']
    #allocation6 [shape = 's32[1]{0}', space=sflag, size = 0x4, scoped, tag = 'scoped memory for tpu_custom_call.1']
    #allocation7 [shape = 's32[1]{0}', space=sflag, size = 0x4, scoped, tag = 'scoped memory for tpu_custom_call.1']
    #allocation8 [shape = 's32[1]{0}', space=sflag, size = 0x4, scoped, tag = 'scoped memory for tpu_custom_call.1']
    #allocation9 [shape = 'u8[1024]{0}', space=smem, size = 0x400, scoped, tag = 'input window, operand 2, single buffered']
    #allocation10 [shape = 'u8[1024]{0}', space=smem, size = 0x400, scoped, tag = 'input window, operand 3, single buffered']
    #allocation11 [shape = 's32[1]{0}', space=sflag, size = 0x4, scoped, tag = 'scoped memory for tpu_custom_call.1']
    #allocation12 [shape = 'u8[8192]{0}', space=vmem, size = 0x2000, scoped, tag = 'output window, operand 0, single buffered']
    %13 = vsyncpa [#allocation6], 0
    %14 = vsyncpa [#allocation8], 0
    %15 = vsyncpa [#allocation11], 0
    %16 = vsyncpa [#allocation7], 0
    // Predicated region
    $region2: #{tpu_custom_call.1} parent=1 // pred_check
      _
    $region3: #{tpu_custom_call.1} parent=1 // pred_check_branch
      %18 = sbr.rel (0) target = $region5
    $region4: #{tpu_custom_call.1} parent=1 // pred_region
      %s20 = ssub.s32 256, 256
      %21 = vsyncadd [#allocation6], %s20
      %s22 = sshll.u32 [#allocation5], 4
      %s23 = int_to_ptr.vmem [resolvable:$true] %s22
      %28 = dma.hbm_to_vmem [thread:$0]  %s1, 256, %s23, [#allocation6], 128, 128, 8
    $region5: #{tpu_custom_call.1} parent=1 // pred_fallthru
      _
    // Predicated region
    $region6: #{tpu_custom_call.1} parent=1 // pred_check
      _
    $region7: #{tpu_custom_call.1} parent=1 // pred_check_branch
      %30 = sbr.rel (0) target = $region9
    $region8: #{tpu_custom_call.1} parent=1 // pred_region
      %s32 = ssub.s32 32, 32
      %33 = vsyncadd [#allocation8], %s32
      %s35 = sshll.u32 %s2, 4
      %s36 = int_to_ptr.vmem [resolvable:$true] %s35
      %38 = dma.vmem_to_smem %s36, 32, [#allocation9], [#allocation8]
    $region9: #{tpu_custom_call.1} parent=1 // pred_fallthru
      _
    // Predicated region
    $region10: #{tpu_custom_call.1} parent=1 // pred_check
      _
    $region11: #{tpu_custom_call.1} parent=1 // pred_check_branch
      %40 = sbr.rel (0) target = $region13
    $region12: #{tpu_custom_call.1} parent=1 // pred_region
      %s42 = ssub.s32 32, 32
      %43 = vsyncadd [#allocation11], %s42
      %s45 = sshll.u32 %s3, 4
      %s46 = int_to_ptr.vmem [resolvable:$true] %s45
      %48 = dma.vmem_to_smem %s46, 32, [#allocation10], [#allocation11]
    $region13: #{tpu_custom_call.1} parent=1 // pred_fallthru
      _
    // Predicated region
    $region14: #{tpu_custom_call.1} parent=1 // pred_check
      _
    $region15: #{tpu_custom_call.1} parent=1 // pred_check_branch
      %50 = sbr.rel (0) target = $region17
    $region16: #{tpu_custom_call.1} parent=1 // pred_region
      %51 = dma.done [#allocation6], 256
    $region17: #{tpu_custom_call.1} parent=1 // pred_fallthru
      _
    // Predicated region
    $region18: #{tpu_custom_call.1} parent=1 // pred_check
      _
    $region19: #{tpu_custom_call.1} parent=1 // pred_check_branch
      %53 = sbr.rel (0) target = $region21
    $region20: #{tpu_custom_call.1} parent=1 // pred_region
      %54 = dma.done [#allocation8], 32
    $region21: #{tpu_custom_call.1} parent=1 // pred_fallthru
      _
    // Predicated region
    $region22: #{tpu_custom_call.1} parent=1 // pred_check
      _
    $region23: #{tpu_custom_call.1} parent=1 // pred_check_branch
      %56 = sbr.rel (0) target = $region25
    $region24: #{tpu_custom_call.1} parent=1 // pred_region
      %57 = dma.done [#allocation11], 32
    $region25: #{tpu_custom_call.1} parent=1 // pred_fallthru
      _
    %58 = sfence
    %s59 = sld [smem:[#allocation4]]
    %s60 = sld [smem:[#allocation4 + $0x1]]
    %s61 = sld [smem:[#allocation4 + $0x2]]
    %s62 = sld [smem:[#allocation9 + %s59]]
    %v63 = vld [vmem:[#allocation5] sm:$0xff]
    %v64 = vld [vmem:[#allocation5 + $0x8] sm:$0xff]
    %v65 = vtanh.pop %v63
    %v66 = vtanh.pop %v64
    %67 = vst [vmem:[#allocation2] sm:$0xff] %v65
    %68 = vst [vmem:[#allocation2 + $0x8] sm:$0xff] %v66
    %v69 = vstv %s62
    %70 = vst [vmem:[#allocation12] sm:$0xff] %v69
    %71 = vst [vmem:[#allocation12 + $0x8] sm:$0xff] %v69
    // While loop
    $region26: #{tpu_custom_call.1} parent=1 // loop_pre_header
      _
    $region27: #{tpu_custom_call.1} parent=1 // loop_header
      %s73 = sphi 0, %s75
      %p74 = scmp.ge.s32.totalorder %s73, %s60
    $region28: #{tpu_custom_call.1} parent=1 // loop_header_branch
      %77 = sbr.rel (%p74) target = $region32
    $region29: #{tpu_custom_call.1} parent=1 // loop_body
      %v78 = vld [vmem:[#allocation2] sm:$0xff]
      %v79 = vld [vmem:[#allocation2 + $0x8] sm:$0xff]
      %v80 = vld [vmem:[#allocation12] sm:$0xff]
      %v81 = vld [vmem:[#allocation12 + $0x8] sm:$0xff]
      %s82 = smul.u32 %s73, 4
      %s83 = sadd.s32 %s59, %s82
      %p84 = scmp.lt.s32.totalorder %s83, %s61
      %s85 = scalar_select %p84, %s83, %s61
      %s86 = sld [smem:[#allocation10 + %s85]]
      %v87 = vstv %s86
      %vm88 = vcmp.gt.f32.partialorder %v78, %v87
      %vm89 = vcmp.gt.f32.partialorder %v79, %v87
      %s90 = sadd.s32 %s85, 1
      %s91 = sld [smem:[#allocation9 + %s90]]
      %v92 = vstv %s91
      %v93 = vsel %vm88, %v92, %v80
      %v94 = vsel %vm89, %v92, %v81
      %s95 = sadd.s32 %s83, 1
      %p96 = scmp.lt.s32.totalorder %s95, %s61
      %s97 = scalar_select %p96, %s95, %s61
      %s98 = sld [smem:[#allocation10 + %s97]]
      %v99 = vstv %s98
      %vm100 = vcmp.gt.f32.partialorder %v78, %v99
      %vm101 = vcmp.gt.f32.partialorder %v79, %v99
      %s102 = sadd.s32 %s97, 1
      %s103 = sld [smem:[#allocation9 + %s102]]
      %v104 = vstv %s103
      %v105 = vsel %vm100, %v104, %v93
      %v106 = vsel %vm101, %v104, %v94
      %s107 = sadd.s32 %s83, 2
      %p108 = scmp.lt.s32.totalorder %s107, %s61
      %s109 = scalar_select %p108, %s107, %s61
      %s110 = sld [smem:[#allocation10 + %s109]]
      %v111 = vstv %s110
      %vm112 = vcmp.gt.f32.partialorder %v78, %v111
      %vm113 = vcmp.gt.f32.partialorder %v79, %v111
      %s114 = sadd.s32 %s109, 1
      %s115 = sld [smem:[#allocation9 + %s114]]
      %v116 = vstv %s115
      %v117 = vsel %vm112, %v116, %v105
      %v118 = vsel %vm113, %v116, %v106
      %s119 = sadd.s32 %s83, 3
      %p120 = scmp.lt.s32.totalorder %s119, %s61
      %s121 = scalar_select %p120, %s119, %s61
      %s122 = sld [smem:[#allocation10 + %s121]]
      %v123 = vstv %s122
      %vm124 = vcmp.gt.f32.partialorder %v78, %v123
      %vm125 = vcmp.gt.f32.partialorder %v79, %v123
      %s126 = sadd.s32 %s121, 1
      %s127 = sld [smem:[#allocation9 + %s126]]
      %v128 = vstv %s127
      %v129 = vsel %vm124, %v128, %v117
      %v130 = vsel %vm125, %v128, %v118
      %131 = vst [vmem:[#allocation12] sm:$0xff] %v129
      %132 = vst [vmem:[#allocation12 + $0x8] sm:$0xff] %v130
    $region30: #{tpu_custom_call.1} parent=1 // loop_footer
      %s75 = sadd.s32 %s73, 1
    $region31: #{tpu_custom_call.1} parent=1 // loop_footer_branch
      %72 = sbr.rel target = $region27
    $region32: #{tpu_custom_call.1} parent=1 // loop_exit
      _
    // Predicated region
    $region33: #{tpu_custom_call.1} parent=1 // pred_check
      _
    $region34: #{tpu_custom_call.1} parent=1 // pred_check_branch
      %134 = sbr.rel (0) target = $region36
    $region35: #{tpu_custom_call.1} parent=1 // pred_region
      %s136 = ssub.s32 256, 256
      %137 = vsyncadd [#allocation7], %s136
      %s138 = sshll.u32 [#allocation12], 4
      %s139 = int_to_ptr.vmem [resolvable:$true] %s138
      %144 = dma.vmem_to_hbm [thread:$0]  %s139, 256, %s4, [#allocation7], 128, 128, 8
    $region36: #{tpu_custom_call.1} parent=1 // pred_fallthru
      _
    // Predicated region
    $region37: #{tpu_custom_call.1} parent=1 // pred_check
      _
    $region38: #{tpu_custom_call.1} parent=1 // pred_check_branch
      %146 = sbr.rel (0) target = $region40
    $region39: #{tpu_custom_call.1} parent=1 // pred_region
      %147 = dma.done [#allocation7], 256
    $region40: #{tpu_custom_call.1} parent=1 // pred_fallthru
      _
    %148 = vsyncpa [#allocation6], 1
    %149 = vsyncpa [#allocation7], 1
    %150 = vsyncpa [#allocation8], 1
    %151 = vsyncpa [#allocation11], 1

</llo_original>
